<compile_context>
chip_gen: v5e
topology: v5e:2x2
jax: 0.10.0
libtpu: 0.0.40
codegen_flags: <defaults>
</compile_context>

<pallas_src>
import functools

import jax
import jax.numpy as jnp
from jax import lax
from jax.experimental import pallas as pl
from jax.experimental.pallas import tpu as pltpu


def _double_conv_kernel(x_ref, w1_ref, b1_ref, w2_ref, b2_ref, o_ref, y1_ref, *,
                        tile_h, W, Cin, Cmid, Cout):
    """One (batch item, H-tile) step.

    x_ref : (H+4, W*Cin)        whole H-padded image of this batch item (lane-dense)
    w1_ref: (3, W*Cin, W*Cmid)  banded conv1 weights, one band per dy tap
    b1_ref: (1, W*Cmid)
    w2_ref: (3, W*Cmid, W*Cout) banded conv2 weights
    b2_ref: (1, W*Cout)
    o_ref : (tile_h, W*Cout)
    y1_ref: (tile_h+2, W*Cmid)  VMEM scratch: conv1+ReLU rows [h0-1, h0+tile_h]
    """
    f32 = jnp.float32
    ht = pl.program_id(1)
    row0 = pl.multiple_of(ht * tile_h, tile_h)     # first padded-input row of this tile

    # ---------------- conv1 (3x3, pad=1) + ReLU ----------------
    # Output rows r in [h0-1, h0+tile_h] (2 halo rows recomputed per tile).
    # Each dy tap is a sublane-offset ref load + one lane-dense MXU matmul; the
    # dx taps and W-padding are encoded in the banded weight matrix.
    acc1 = jnp.zeros((tile_h + 2, W * Cmid), f32)
    for dy in range(3):
        xs = x_ref[pl.ds(row0 + dy, tile_h + 2), :]            # (tile_h+2, W*Cin)
        acc1 += jnp.dot(xs, w1_ref[dy], preferred_element_type=f32)
    y1_ref[...] = jnp.maximum(acc1 + b1_ref[...], 0.0)

    # conv2's padding=1 along H: halo rows that fall outside the image are zero.
    @pl.when(ht == 0)
    def _():
        y1_ref[0:1, :] = jnp.zeros((1, W * Cmid), f32)

    @pl.when(ht == pl.num_programs(1) - 1)
    def _():
        y1_ref[tile_h + 1:tile_h + 2, :] = jnp.zeros((1, W * Cmid), f32)

    # ---------------- conv2 (3x3, pad=1) + ReLU ----------------
    acc2 = jnp.zeros((tile_h, W * Cout), f32)
    for dy in range(3):
        ys = y1_ref[pl.ds(dy, tile_h), :]                      # (tile_h, W*Cmid)
        acc2 += jnp.dot(ys, w2_ref[dy], preferred_element_type=f32)
    # result is already in the lane-dense (tile_h, W*Cout) output layout
    o_ref[...] = jnp.maximum(acc2 + b2_ref[...], 0.0).astype(o_ref.dtype)


def _banded_weights(w_oihw, W):
    """OIHW 3x3 weights -> per-dy banded matrices of shape (3, W*Cin, W*Cout).

    B[dy, (w+dx-1)*Cin + ci, w*Cout + co] = w[co, ci, dy, dx]; out-of-range
    source columns are dropped, which implements padding=1 along W.
    """
    Cout, Cin, KH, KW = w_oihw.shape
    w = jnp.transpose(w_oihw, (2, 3, 1, 0))                    # (3, 3, Cin, Cout)
    B = jnp.zeros((KH, W * Cin, W * Cout), w_oihw.dtype)
    for dx in range(KW):
        for col in range(W):
            src = col + dx - 1
            if 0 <= src < W:
                B = B.at[:, src * Cin:(src + 1) * Cin,
                         col * Cout:(col + 1) * Cout].set(w[:, dx])
    return B


def double_conv_pallas(x_nchw, w1_oihw, b1, w2_oihw, b2, *, tile_h=8):
    """DoubleConv.forward for NCHW input with PyTorch OIHW weights."""
    N, Cin, H, W = x_nchw.shape
    Cmid = w1_oihw.shape[0]
    Cout = w2_oihw.shape[0]
    if H % tile_h != 0:
        tile_h = H
    n_ht = H // tile_h

    # NCHW -> lane-dense (N, H, W*Cin); 2 zero halo rows on each side so every
    # tile (including its recomputed conv1 halo rows) reads a uniform window.
    x = jnp.transpose(x_nchw, (0, 2, 3, 1)).reshape(N, H, W * Cin)
    xp = jnp.pad(x, ((0, 0), (2, 2), (0, 0)))

    w1 = _banded_weights(w1_oihw, W)                 # (3, W*Cin,  W*Cmid)
    w2 = _banded_weights(w2_oihw, W)                 # (3, W*Cmid, W*Cout)
    b1t = jnp.tile(b1, W).reshape(1, W * Cmid)       # lane idx = w*Cmid + c
    b2t = jnp.tile(b2, W).reshape(1, W * Cout)

    kernel = functools.partial(_double_conv_kernel, tile_h=tile_h, W=W,
                               Cin=Cin, Cmid=Cmid, Cout=Cout)
    y = pl.pallas_call(
        kernel,
        out_shape=jax.ShapeDtypeStruct((N, H, W * Cout), x_nchw.dtype),
        grid=(N, n_ht),
        in_specs=[
            # whole padded image per batch item; index constant over ht so it is
            # DMA'd once per n and reused across the H-tiles
            pl.BlockSpec((None, H + 4, W * Cin), lambda n, t: (n, 0, 0)),
            pl.BlockSpec((3, W * Cin, W * Cmid), lambda n, t: (0, 0, 0)),
            pl.BlockSpec((1, W * Cmid), lambda n, t: (0, 0)),
            pl.BlockSpec((3, W * Cmid, W * Cout), lambda n, t: (0, 0, 0)),
            pl.BlockSpec((1, W * Cout), lambda n, t: (0, 0)),
        ],
        out_specs=pl.BlockSpec((None, tile_h, W * Cout), lambda n, t: (n, t, 0)),
        scratch_shapes=[pltpu.VMEM((tile_h + 2, W * Cmid), jnp.float32)],
        compiler_params=pltpu.CompilerParams(
            dimension_semantics=("parallel", "parallel")),
    )(xp, w1, b1t, w2, b2t)

    # lane-dense (N, H, W*Cout) -> NCHW
    return jnp.transpose(y.reshape(N, H, W, Cout), (0, 3, 1, 2))


# ---------------- pure-JAX reference (correctness check only) ----------------
def _ref_conv3x3(x, w, b):
    y = lax.conv_general_dilated(x, w, (1, 1), ((1, 1), (1, 1)),
                                 dimension_numbers=('NCHW', 'OIHW', 'NCHW'),
                                 precision=lax.Precision.HIGHEST)
    return jnp.maximum(y + b[None, :, None, None], 0.0)


def ref_forward(params, x):
    y = _ref_conv3x3(x, params['c1_w'], params['c1_b'])
    return _ref_conv3x3(y, params['c2_w'], params['c2_b'])


if __name__ == "__main__":
    N, in_ch, out_ch, H, W = 2, 4, 8, 16, 16   # DoubleConv(in_ch=4, out_ch=8)

    key = jax.random.PRNGKey(0)
    ks = jax.random.split(key, 5)
    params = {
        'c1_w': 0.1 * jax.random.normal(ks[0], (out_ch, in_ch, 3, 3), jnp.float32),
        'c1_b': 0.1 * jax.random.normal(ks[1], (out_ch,), jnp.float32),
        'c2_w': 0.1 * jax.random.normal(ks[2], (out_ch, out_ch, 3, 3), jnp.float32),
        'c2_b': 0.1 * jax.random.normal(ks[3], (out_ch,), jnp.float32),
    }
    x = jax.random.normal(ks[4], (N, in_ch, H, W), jnp.float32)   # NCHW

    out = jax.block_until_ready(
        double_conv_pallas(x, params['c1_w'], params['c1_b'],
                           params['c2_w'], params['c2_b']))
    ref = jax.block_until_ready(ref_forward(params, x))

    assert out.shape == (N, out_ch, H, W), out.shape
    assert jnp.allclose(out, ref, atol=1e-4, rtol=1e-4), \
        float(jnp.max(jnp.abs(out - ref)))
    print("KERNEL_OK")
</pallas_src>

<mosaic_0001>
module attributes {stable_mosaic.version = 11 : i64} {
  func.func @_double_conv_kernel(%arg0: i32, %arg1: i32, %arg2: memref<1x20x64xf32, #tpu.memory_space<vmem>>, %arg3: memref<3x64x128xf32, #tpu.memory_space<vmem>>, %arg4: memref<1x128xf32, #tpu.memory_space<vmem>>, %arg5: memref<3x128x128xf32, #tpu.memory_space<vmem>>, %arg6: memref<1x128xf32, #tpu.memory_space<vmem>>, %arg7: memref<1x8x128xf32, #tpu.memory_space<vmem>>, %arg8: memref<10x128xf32, #tpu.memory_space<vmem>>) attributes {dimension_semantics = [#tpu.dimension_semantics<parallel>, #tpu.dimension_semantics<parallel>], iteration_bounds = array<i64: 2, 2>, scalar_prefetch = 0 : i64, scratch_operands = 1 : i64, tpu.core_type = #tpu.core_type<tc>, window_params = [{transform_indices = @transform_0, window_bounds = array<i64: 1, 20, 64>}, {pipeline_mode = #tpu.pipeline_mode<synchronous>, transform_indices = @transform_1, window_bounds = array<i64: 3, 64, 128>}, {pipeline_mode = #tpu.pipeline_mode<synchronous>, transform_indices = @transform_2, window_bounds = array<i64: 1, 128>}, {pipeline_mode = #tpu.pipeline_mode<synchronous>, transform_indices = @transform_3, window_bounds = array<i64: 3, 128, 128>}, {pipeline_mode = #tpu.pipeline_mode<synchronous>, transform_indices = @transform_4, window_bounds = array<i64: 1, 128>}, {transform_indices = @transform_5, window_bounds = array<i64: 1, 8, 128>}]} {
    %c8_i32 = arith.constant 8 : i32
    %0 = arith.muli %arg1, %c8_i32 : i32
    %1 = tpu.assume_multiple %0, 8 : i32
    %cst = arith.constant 0.000000e+00 : f32
    %2 = vector.broadcast %cst : f32 to vector<10x128xf32>
    %c0_i32 = arith.constant 0 : i32
    %3 = arith.addi %1, %c0_i32 : i32
    %c0 = arith.constant 0 : index
    %4 = arith.index_cast %3 : i32 to index
    %c0_0 = arith.constant 0 : index
    %5 = vector.load %arg2[%c0, %4, %c0_0] : memref<1x20x64xf32, #tpu.memory_space<vmem>>, vector<1x10x64xf32>
    %6 = vector.shape_cast %5 : vector<1x10x64xf32> to vector<10x64xf32>
    %c0_1 = arith.constant 0 : index
    %c0_2 = arith.constant 0 : index
    %c0_3 = arith.constant 0 : index
    %7 = vector.load %arg3[%c0_1, %c0_2, %c0_3] : memref<3x64x128xf32, #tpu.memory_space<vmem>>, vector<1x64x128xf32>
    %8 = vector.shape_cast %7 : vector<1x64x128xf32> to vector<64x128xf32>
    %cst_4 = arith.constant dense<0.000000e+00> : vector<10x128xf32>
    %9 = tpu.matmul %6, %8, %cst_4 {dimension_numbers = #tpu.dot_dimension_numbers<[1], [0], [0], [1], [0, 0, 1, 1], [], []>} : vector<10x64xf32>, vector<64x128xf32>, vector<10x128xf32> -> vector<10x128xf32>
    %10 = arith.addf %2, %9 : vector<10x128xf32>
    %c1_i32 = arith.constant 1 : i32
    %11 = arith.addi %1, %c1_i32 : i32
    %c0_5 = arith.constant 0 : index
    %12 = arith.index_cast %11 : i32 to index
    %c0_6 = arith.constant 0 : index
    %13 = vector.load %arg2[%c0_5, %12, %c0_6] : memref<1x20x64xf32, #tpu.memory_space<vmem>>, vector<1x10x64xf32>
    %14 = vector.shape_cast %13 : vector<1x10x64xf32> to vector<10x64xf32>
    %c1 = arith.constant 1 : index
    %c0_7 = arith.constant 0 : index
    %c0_8 = arith.constant 0 : index
    %15 = vector.load %arg3[%c1, %c0_7, %c0_8] : memref<3x64x128xf32, #tpu.memory_space<vmem>>, vector<1x64x128xf32>
    %16 = vector.shape_cast %15 : vector<1x64x128xf32> to vector<64x128xf32>
    %cst_9 = arith.constant dense<0.000000e+00> : vector<10x128xf32>
    %17 = tpu.matmul %14, %16, %cst_9 {dimension_numbers = #tpu.dot_dimension_numbers<[1], [0], [0], [1], [0, 0, 1, 1], [], []>} : vector<10x64xf32>, vector<64x128xf32>, vector<10x128xf32> -> vector<10x128xf32>
    %18 = arith.addf %10, %17 : vector<10x128xf32>
    %c2_i32 = arith.constant 2 : i32
    %19 = arith.addi %1, %c2_i32 : i32
    %c0_10 = arith.constant 0 : index
    %20 = arith.index_cast %19 : i32 to index
    %c0_11 = arith.constant 0 : index
    %21 = vector.load %arg2[%c0_10, %20, %c0_11] : memref<1x20x64xf32, #tpu.memory_space<vmem>>, vector<1x10x64xf32>
    %22 = vector.shape_cast %21 : vector<1x10x64xf32> to vector<10x64xf32>
    %c2 = arith.constant 2 : index
    %c0_12 = arith.constant 0 : index
    %c0_13 = arith.constant 0 : index
    %23 = vector.load %arg3[%c2, %c0_12, %c0_13] : memref<3x64x128xf32, #tpu.memory_space<vmem>>, vector<1x64x128xf32>
    %24 = vector.shape_cast %23 : vector<1x64x128xf32> to vector<64x128xf32>
    %cst_14 = arith.constant dense<0.000000e+00> : vector<10x128xf32>
    %25 = tpu.matmul %22, %24, %cst_14 {dimension_numbers = #tpu.dot_dimension_numbers<[1], [0], [0], [1], [0, 0, 1, 1], [], []>} : vector<10x64xf32>, vector<64x128xf32>, vector<10x128xf32> -> vector<10x128xf32>
    %26 = arith.addf %18, %25 : vector<10x128xf32>
    %c0_15 = arith.constant 0 : index
    %c0_16 = arith.constant 0 : index
    %27 = vector.load %arg4[%c0_15, %c0_16] : memref<1x128xf32, #tpu.memory_space<vmem>>, vector<1x128xf32>
    %28 = vector.broadcast %27 : vector<1x128xf32> to vector<10x128xf32>
    %29 = arith.addf %26, %28 : vector<10x128xf32>
    %cst_17 = arith.constant 0.000000e+00 : f32
    %30 = vector.broadcast %cst_17 : f32 to vector<10x128xf32>
    %31 = arith.maximumf %29, %30 : vector<10x128xf32>
    %c0_18 = arith.constant 0 : index
    %c0_19 = arith.constant 0 : index
    %32 = vector.load %arg8[%c0_18, %c0_19] : memref<10x128xf32, #tpu.memory_space<vmem>>, vector<10x128xf32>
    tpu.vector_store %arg8[%c0_18, %c0_19], %31 {strides = array<i32>} : memref<10x128xf32, #tpu.memory_space<vmem>>, vector<10x128xf32>,
    %c0_i32_20 = arith.constant 0 : i32
    %33 = arith.cmpi eq, %arg1, %c0_i32_20 : i32
    %34 = arith.extui %33 : i1 to i32
    %c0_i32_21 = arith.constant 0 : i32
    %35 = arith.cmpi ne, %34, %c0_i32_21 : i32
    scf.if %35 {
      %cst_49 = arith.constant 0.000000e+00 : f32
      %63 = vector.broadcast %cst_49 : f32 to vector<1x128xf32>
      %c0_50 = arith.constant 0 : index
      %c0_51 = arith.constant 0 : index
      %64 = vector.load %arg8[%c0_50, %c0_51] : memref<10x128xf32, #tpu.memory_space<vmem>>, vector<1x128xf32>
      tpu.vector_store %arg8[%c0_50, %c0_51], %63 {strides = array<i32>} : memref<10x128xf32, #tpu.memory_space<vmem>>, vector<1x128xf32>,
    } else {
    }
    %c1_i32_22 = arith.constant 1 : i32
    %36 = arith.cmpi eq, %arg1, %c1_i32_22 : i32
    %37 = arith.extui %36 : i1 to i32
    %c0_i32_23 = arith.constant 0 : i32
    %38 = arith.cmpi ne, %37, %c0_i32_23 : i32
    scf.if %38 {
      %cst_49 = arith.constant 0.000000e+00 : f32
      %63 = vector.broadcast %cst_49 : f32 to vector<1x128xf32>
      %c9 = arith.constant 9 : index
      %c0_50 = arith.constant 0 : index
      %64 = vector.load %arg8[%c9, %c0_50] : memref<10x128xf32, #tpu.memory_space<vmem>>, vector<1x128xf32>
      tpu.vector_store %arg8[%c9, %c0_50], %63 {strides = array<i32>} : memref<10x128xf32, #tpu.memory_space<vmem>>, vector<1x128xf32>,
    } else {
    }
    %cst_24 = arith.constant 0.000000e+00 : f32
    %39 = vector.broadcast %cst_24 : f32 to vector<8x128xf32>
    %c0_25 = arith.constant 0 : index
    %c0_26 = arith.constant 0 : index
    %40 = vector.load %arg8[%c0_25, %c0_26] : memref<10x128xf32, #tpu.memory_space<vmem>>, vector<8x128xf32>
    %c0_27 = arith.constant 0 : index
    %c0_28 = arith.constant 0 : index
    %c0_29 = arith.constant 0 : index
    %41 = vector.load %arg5[%c0_27, %c0_28, %c0_29] : memref<3x128x128xf32, #tpu.memory_space<vmem>>, vector<1x128x128xf32>
    %42 = vector.shape_cast %41 : vector<1x128x128xf32> to vector<128x128xf32>
    %cst_30 = arith.constant dense<0.000000e+00> : vector<8x128xf32>
    %43 = tpu.matmul %40, %42, %cst_30 {dimension_numbers = #tpu.dot_dimension_numbers<[1], [0], [0], [1], [0, 0, 1, 1], [], []>} : vector<8x128xf32>, vector<128x128xf32>, vector<8x128xf32> -> vector<8x128xf32>
    %44 = arith.addf %39, %43 : vector<8x128xf32>
    %c1_31 = arith.constant 1 : index
    %c0_32 = arith.constant 0 : index
    %45 = vector.load %arg8[%c1_31, %c0_32] : memref<10x128xf32, #tpu.memory_space<vmem>>, vector<8x128xf32>
    %c1_33 = arith.constant 1 : index
    %c0_34 = arith.constant 0 : index
    %c0_35 = arith.constant 0 : index
    %46 = vector.load %arg5[%c1_33, %c0_34, %c0_35] : memref<3x128x128xf32, #tpu.memory_space<vmem>>, vector<1x128x128xf32>
    %47 = vector.shape_cast %46 : vector<1x128x128xf32> to vector<128x128xf32>
    %cst_36 = arith.constant dense<0.000000e+00> : vector<8x128xf32>
    %48 = tpu.matmul %45, %47, %cst_36 {dimension_numbers = #tpu.dot_dimension_numbers<[1], [0], [0], [1], [0, 0, 1, 1], [], []>} : vector<8x128xf32>, vector<128x128xf32>, vector<8x128xf32> -> vector<8x128xf32>
    %49 = arith.addf %44, %48 : vector<8x128xf32>
    %c2_37 = arith.constant 2 : index
    %c0_38 = arith.constant 0 : index
    %50 = vector.load %arg8[%c2_37, %c0_38] : memref<10x128xf32, #tpu.memory_space<vmem>>, vector<8x128xf32>
    %c2_39 = arith.constant 2 : index
    %c0_40 = arith.constant 0 : index
    %c0_41 = arith.constant 0 : index
    %51 = vector.load %arg5[%c2_39, %c0_40, %c0_41] : memref<3x128x128xf32, #tpu.memory_space<vmem>>, vector<1x128x128xf32>
    %52 = vector.shape_cast %51 : vector<1x128x128xf32> to vector<128x128xf32>
    %cst_42 = arith.constant dense<0.000000e+00> : vector<8x128xf32>
    %53 = tpu.matmul %50, %52, %cst_42 {dimension_numbers = #tpu.dot_dimension_numbers<[1], [0], [0], [1], [0, 0, 1, 1], [], []>} : vector<8x128xf32>, vector<128x128xf32>, vector<8x128xf32> -> vector<8x128xf32>
    %54 = arith.addf %49, %53 : vector<8x128xf32>
    %c0_43 = arith.constant 0 : index
    %c0_44 = arith.constant 0 : index
    %55 = vector.load %arg6[%c0_43, %c0_44] : memref<1x128xf32, #tpu.memory_space<vmem>>, vector<1x128xf32>
    %56 = vector.broadcast %55 : vector<1x128xf32> to vector<8x128xf32>
    %57 = arith.addf %54, %56 : vector<8x128xf32>
    %cst_45 = arith.constant 0.000000e+00 : f32
    %58 = vector.broadcast %cst_45 : f32 to vector<8x128xf32>
    %59 = arith.maximumf %57, %58 : vector<8x128xf32>
    %c0_46 = arith.constant 0 : index
    %c0_47 = arith.constant 0 : index
    %c0_48 = arith.constant 0 : index
    %60 = vector.load %arg7[%c0_46, %c0_47, %c0_48] : memref<1x8x128xf32, #tpu.memory_space<vmem>>, vector<1x8x128xf32>
    %61 = vector.shape_cast %60 : vector<1x8x128xf32> to vector<8x128xf32>
    %62 = vector.shape_cast %59 : vector<8x128xf32> to vector<1x8x128xf32>
    tpu.vector_store %arg7[%c0_46, %c0_47, %c0_48], %62 {strides = array<i32>} : memref<1x8x128xf32, #tpu.memory_space<vmem>>, vector<1x8x128xf32>,
    return
  }
  func.func @transform_0(%arg0: i32, %arg1: i32) -> (i32, i32, i32) {
    %c0_i32 = arith.constant 0 : i32
    %c0_i32_0 = arith.constant 0 : i32
    %c0_i32_1 = arith.constant 0 : i32
    return %arg0, %c0_i32, %c0_i32_0 : i32, i32, i32
  }
  func.func @transform_1(%arg0: i32, %arg1: i32) -> (i32, i32, i32) {
    %c0_i32 = arith.constant 0 : i32
    %c0_i32_0 = arith.constant 0 : i32
    %c0_i32_1 = arith.constant 0 : i32
    %c0_i32_2 = arith.constant 0 : i32
    return %c0_i32, %c0_i32_0, %c0_i32_1 : i32, i32, i32
  }
  func.func @transform_2(%arg0: i32, %arg1: i32) -> (i32, i32) {
    %c0_i32 = arith.constant 0 : i32
    %c0_i32_0 = arith.constant 0 : i32
    %c0_i32_1 = arith.constant 0 : i32
    return %c0_i32, %c0_i32_0 : i32, i32
  }
  func.func @transform_3(%arg0: i32, %arg1: i32) -> (i32, i32, i32) {
    %c0_i32 = arith.constant 0 : i32
    %c0_i32_0 = arith.constant 0 : i32
    %c0_i32_1 = arith.constant 0 : i32
    %c0_i32_2 = arith.constant 0 : i32
    return %c0_i32, %c0_i32_0, %c0_i32_1 : i32, i32, i32
  }
  func.func @transform_4(%arg0: i32, %arg1: i32) -> (i32, i32) {
    %c0_i32 = arith.constant 0 : i32
    %c0_i32_0 = arith.constant 0 : i32
    %c0_i32_1 = arith.constant 0 : i32
    return %c0_i32, %c0_i32_0 : i32, i32
  }
  func.func @transform_5(%arg0: i32, %arg1: i32) -> (i32, i32, i32) {
    %c0_i32 = arith.constant 0 : i32
    %c0_i32_0 = arith.constant 0 : i32
    return %arg0, %arg1, %c0_i32 : i32, i32, i32
  }
}

</mosaic_0001>

<llo_original>
// kernel: tpu_custom_call.1
$region0: #{tpu_custom_call.1}
  #allocation0 [shape = 'u32[]', space=smem, size = 0x4, offset = 0x4, fixed_abs, tag = 'smem constant byte address 0x4 - core index']
  #allocation1 [shape = 'u32[72,128]{1,0:T(1,128)}', space=vmem, size = 0x9000, scoped, tag = 'internal scratch']
  #allocation2 [shape = 'f32[10,128]{1,0:T(8,128)}', space=vmem, size = 0x2000, scoped, tag = 'scratch operand']
  %s0 = inlined_call_operand.vmem [shape: f32[2,20,64], index: 0, kind: input, shape index: {}]
  %s1 = inlined_call_operand.hbm [shape: f32[3,64,128], index: 1, kind: input, shape index: {}]
  %s2 = inlined_call_operand.vmem [shape: f32[1,128], index: 2, kind: input, shape index: {}]
  %s3 = inlined_call_operand.hbm [shape: f32[3,128,128], index: 3, kind: input, shape index: {}]
  %s4 = inlined_call_operand.vmem [shape: f32[1,128], index: 4, kind: input, shape index: {}]
  %s5 = inlined_call_operand.hbm [shape: f32[2,16,128], index: 5, kind: output, shape index: {}]
  %s6 = sld [smem:[#allocation0]]
  $region69: #{tpu_custom_call.1} parent=0
    _
  %s8 = ssub.s32 1, %s6
  %s9 = scalar_select 0, %s8, %s6
  $region1: #{tpu_custom_call.1} parent=0
    #allocation3 [shape = 'u8[98304]{0}', space=vmem, size = 0x18000, scoped, tag = 'input window, operand 1, single buffered']
    #allocation4 [shape = 's32[2]{0}', space=sflag, size = 0x8, scoped, tag = 'scoped memory for tpu_custom_call.1']
    #allocation5 [shape = 's32[2]{0}', space=sflag, size = 0x8, scoped, tag = 'scoped memory for tpu_custom_call.1']
    #allocation6 [shape = 'u8[196608]{0}', space=vmem, size = 0x30000, scoped, tag = 'input window, operand 3, single buffered']
    #allocation7 [shape = 's32[1]{0}', space=sflag, size = 0x4, scoped, tag = 'scoped memory for tpu_custom_call.1']
    #allocation8 [shape = 'u8[8192]{0}', space=vmem, size = 0x2000, scoped, tag = 'output window, operand 0']
    %10 = vsyncpa [#allocation4], 0
    %11 = vsyncpa [#allocation7], 0
    %12 = vsyncpa [#allocation5], 0
    %s13 = scalar_lea.sflag [#allocation5], 1
    %14 = vsyncpa %s13, 0
    loop: start=0, step=1, limit=6
    $region2: #{tpu_custom_call.1} parent=1 // loop_pre_header
      _
    $region3: #{tpu_custom_call.1} parent=1 // loop_header
      %s16 = sphi 0, %s20
      %p17 = scmp.ge.s32.totalorder %s16, 6
      %s23 = sphi 0, %s35
      %s24 = sphi 0, %s31
      %s25 = sphi 0, %s23
      %s26 = sphi 0, %s24
      %s27 = sphi 0, %s25
      %s28 = sphi 0, %s26
      %s38 = sphi 0, %s40
      %s41 = sphi 0, %s38
      %s42 = sphi 0, %s41
      %s58 = sphi 0, %s42
      %s62 = sphi 0, %s62
      %s64 = sphi 0, %s62
      %s65 = sphi 0, %s64
      %s79 = sphi 0, %s65
      %s83 = sphi 0, %s83
      %s85 = sphi 0, %s83
      %s86 = sphi 0, %s85
      %s100 = sphi 0, %s86
      %s104 = sphi 0, %s104
      %s106 = sphi 0, %s104
      %s107 = sphi 0, %s106
      %s121 = sphi 0, %s107
      %s125 = sphi 0, %s125
      %s127 = sphi 0, %s125
      %s128 = sphi 0, %s127
      %s142 = sphi 0, %s128
      %s150 = sphi 0, %s152
      %s153 = sphi 0, %s150
      %s154 = sphi 0, %s153
      %s170 = sphi 0, %s154
    $region4: #{tpu_custom_call.1} parent=1 // loop_header_branch
      %19 = sbr.rel (%p17) target = $region8
    $region5: #{tpu_custom_call.1} parent=1 // loop_body
      %s21 = ssub.s32 %s16, 1
      %s22 = ssub.s32 %s16, 2
      %s29 = sadd.s32 1, %s24
      %p30 = scmp.ge.s32.totalorder %s29, 2
      %s31 = scalar_select %p30, 0, %s29
      %s32 = sadd.s32 1, %s23
      %s33 = scalar_select %p30, %s32, %s23
      %p34 = scmp.ge.s32.totalorder %s33, 2
      %s35 = scalar_select %p34, 0, %s33
      %s36 = ssub.s32 %s23, %s35
      %p37 = scmp.eq.s32.totalorder %s36, 0
      %s39 = sadd.s32 %s38, 1
      %s40 = scalar_select %p37, %s38, %s39
      %p43 = pneg %p37
      %p44 = scmp.eq.s32.totalorder %s16, 3
      %p45 = por %p43, %p44
      %p46 = scmp.ne.s32.totalorder %s38, %s41
      %p47 = scmp.eq.s32.totalorder %s16, 0
      %p48 = por %p46, %p47
      %p49 = scmp.ne.s32.totalorder %s38, %s41
      %p50 = scmp.eq.s32.totalorder %s21, 3
      %p51 = por %p49, %p50
      %p52 = scmp.ne.s32.totalorder %s41, %s42
      %p53 = scmp.eq.s32.totalorder %s21, 0
      %p54 = por %p52, %p53
      %p55 = scmp.ne.s32.totalorder %s41, %s42
      %p56 = scmp.eq.s32.totalorder %s22, 3
      %p57 = por %p55, %p56
      %p59 = scmp.ne.s32.totalorder %s42, %s58
      %p60 = scmp.eq.s32.totalorder %s22, 0
      %p61 = por %p59, %p60
      %s63 = sadd.s32 %s62, 1
      %p66 = scmp.eq.s32.totalorder %s16, 3
      %p67 = scmp.ne.s32.totalorder %s62, %s64
      %p68 = scmp.eq.s32.totalorder %s16, 0
      %p69 = por %p67, %p68
      %p70 = scmp.ne.s32.totalorder %s62, %s64
      %p71 = scmp.eq.s32.totalorder %s21, 3
      %p72 = por %p70, %p71
      %p73 = scmp.ne.s32.totalorder %s64, %s65
      %p74 = scmp.eq.s32.totalorder %s21, 0
      %p75 = por %p73, %p74
      %p76 = scmp.ne.s32.totalorder %s64, %s65
      %p77 = scmp.eq.s32.totalorder %s22, 3
      %p78 = por %p76, %p77
      %p80 = scmp.ne.s32.totalorder %s65, %s79
      %p81 = scmp.eq.s32.totalorder %s22, 0
      %p82 = por %p80, %p81
      %s84 = sadd.s32 %s83, 1
      %p87 = scmp.eq.s32.totalorder %s16, 3
      %p88 = scmp.ne.s32.totalorder %s83, %s85
      %p89 = scmp.eq.s32.totalorder %s16, 0
      %p90 = por %p88, %p89
      %p91 = scmp.ne.s32.totalorder %s83, %s85
      %p92 = scmp.eq.s32.totalorder %s21, 3
      %p93 = por %p91, %p92
      %p94 = scmp.ne.s32.totalorder %s85, %s86
      %p95 = scmp.eq.s32.totalorder %s21, 0
      %p96 = por %p94, %p95
      %p97 = scmp.ne.s32.totalorder %s85, %s86
      %p98 = scmp.eq.s32.totalorder %s22, 3
      %p99 = por %p97, %p98
      %p101 = scmp.ne.s32.totalorder %s86, %s100
      %p102 = scmp.eq.s32.totalorder %s22, 0
      %p103 = por %p101, %p102
      %s105 = sadd.s32 %s104, 1
      %p108 = scmp.eq.s32.totalorder %s16, 3
      %p109 = scmp.ne.s32.totalorder %s104, %s106
      %p110 = scmp.eq.s32.totalorder %s16, 0
      %p111 = por %p109, %p110
      %p112 = scmp.ne.s32.totalorder %s104, %s106
      %p113 = scmp.eq.s32.totalorder %s21, 3
      %p114 = por %p112, %p113
      %p115 = scmp.ne.s32.totalorder %s106, %s107
      %p116 = scmp.eq.s32.totalorder %s21, 0
      %p117 = por %p115, %p116
      %p118 = scmp.ne.s32.totalorder %s106, %s107
      %p119 = scmp.eq.s32.totalorder %s22, 3
      %p120 = por %p118, %p119
      %p122 = scmp.ne.s32.totalorder %s107, %s121
      %p123 = scmp.eq.s32.totalorder %s22, 0
      %p124 = por %p122, %p123
      %s126 = sadd.s32 %s125, 1
      %p129 = scmp.eq.s32.totalorder %s16, 3
      %p130 = scmp.ne.s32.totalorder %s125, %s127
      %p131 = scmp.eq.s32.totalorder %s16, 0
      %p132 = por %p130, %p131
      %p133 = scmp.ne.s32.totalorder %s125, %s127
      %p134 = scmp.eq.s32.totalorder %s21, 3
      %p135 = por %p133, %p134
      %p136 = scmp.ne.s32.totalorder %s127, %s128
      %p137 = scmp.eq.s32.totalorder %s21, 0
      %p138 = por %p136, %p137
      %p139 = scmp.ne.s32.totalorder %s127, %s128
      %p140 = scmp.eq.s32.totalorder %s22, 3
      %p141 = por %p139, %p140
      %p143 = scmp.ne.s32.totalorder %s128, %s142
      %p144 = scmp.eq.s32.totalorder %s22, 0
      %p145 = por %p143, %p144
      %s146 = ssub.s32 %s23, %s35
      %s147 = ssub.s32 %s24, %s31
      %s148 = sor.u32 %s146, %s147
      %p149 = scmp.eq.s32.totalorder %s148, 0
      %s151 = sadd.s32 %s150, 1
      %s152 = scalar_select %p149, %s150, %s151
      %p155 = pneg %p149
      %p156 = scmp.eq.s32.totalorder %s16, 3
      %p157 = por %p155, %p156
      %p158 = scmp.ne.s32.totalorder %s150, %s153
      %p159 = scmp.eq.s32.totalorder %s16, 0
      %p160 = por %p158, %p159
      %p161 = scmp.ne.s32.totalorder %s150, %s153
      %p162 = scmp.eq.s32.totalorder %s21, 3
      %p163 = por %p161, %p162
      %p164 = scmp.ne.s32.totalorder %s153, %s154
      %p165 = scmp.eq.s32.totalorder %s21, 0
      %p166 = por %p164, %p165
      %p167 = scmp.ne.s32.totalorder %s153, %s154
      %p168 = scmp.eq.s32.totalorder %s22, 3
      %p169 = por %p167, %p168
      %p171 = scmp.ne.s32.totalorder %s154, %s170
      %p172 = scmp.eq.s32.totalorder %s22, 0
      %p173 = por %p171, %p172
      %p174 = scmp.le.s32.totalorder 1, %s16
      %p175 = scmp.lt.s32.totalorder %s16, 5
      %p176 = pnand %p174, %p175
      %p177 = pneg %p176
      // Predicated region
      $region9: #{tpu_custom_call.1} parent=5 // pred_check
        _
      $region10: #{tpu_custom_call.1} parent=5 // pred_check_branch
        %179 = sbr.rel (%p176) target = $region12
      $region11: #{tpu_custom_call.1} parent=5 // pred_region
        %s180 = ssub.s32 %s16, 1
        // Predicated region
        $region13: #{tpu_custom_call.1} parent=11 // pred_check
          %p181 = pneg %p75
        $region14: #{tpu_custom_call.1} parent=11 // pred_check_branch
          %183 = sbr.rel (%p181) target = $region16
        $region15: #{tpu_custom_call.1} parent=11 // pred_region
          %185 = vsyncadd [#allocation4], 0
          %s186 = sshll.u32 %s1, 4
          %s187 = int_to_ptr.hbm [resolvable:$true] %s186
          %s188 = sshll.u32 [#allocation3], 4
          %s189 = int_to_ptr.vmem [resolvable:$true] %s188
          %194 = dma.hbm_to_vmem [thread:$0]  %s187, 3072, %s189, [#allocation4], 128, 128, 8
        $region16: #{tpu_custom_call.1} parent=11 // pred_fallthru
          _
        // Predicated region
        $region17: #{tpu_custom_call.1} parent=11 // pred_check
          %p195 = pneg %p96
        $region18: #{tpu_custom_call.1} parent=11 // pred_check_branch
          %197 = sbr.rel (%p195) target = $region20
        $region19: #{tpu_custom_call.1} parent=11 // pred_region
          _
        $region20: #{tpu_custom_call.1} parent=11 // pred_fallthru
          _
        // Predicated region
        $region21: #{tpu_custom_call.1} parent=11 // pred_check
          %p198 = pneg %p117
        $region22: #{tpu_custom_call.1} parent=11 // pred_check_branch
          %200 = sbr.rel (%p198) target = $region24
        $region23: #{tpu_custom_call.1} parent=11 // pred_region
          %202 = vsyncadd [#allocation7], 0
          %s203 = sshll.u32 %s3, 4
          %s204 = int_to_ptr.hbm [resolvable:$true] %s203
          %s205 = sshll.u32 [#allocation6], 4
          %s206 = int_to_ptr.vmem [resolvable:$true] %s205
          %211 = dma.hbm_to_vmem [thread:$0]  %s204, 6144, %s206, [#allocation7], 128, 128, 8
        $region24: #{tpu_custom_call.1} parent=11 // pred_fallthru
          _
        // Predicated region
        $region25: #{tpu_custom_call.1} parent=11 // pred_check
          %p212 = pneg %p138
        $region26: #{tpu_custom_call.1} parent=11 // pred_check_branch
          %214 = sbr.rel (%p212) target = $region28
        $region27: #{tpu_custom_call.1} parent=11 // pred_region
          _
        $region28: #{tpu_custom_call.1} parent=11 // pred_fallthru
          _
      $region12: #{tpu_custom_call.1} parent=5 // pred_fallthru
        _
      %p215 = scmp.lt.s32.totalorder %s16, 4
      // Predicated region
      $region29: #{tpu_custom_call.1} parent=5 // pred_check
        %p216 = pneg %p215
      $region30: #{tpu_custom_call.1} parent=5 // pred_check_branch
        %218 = sbr.rel (%p216) target = $region32
      $region31: #{tpu_custom_call.1} parent=5 // pred_region
        // Predicated region
        $region33: #{tpu_custom_call.1} parent=31 // pred_check
          %p219 = pneg %p48
        $region34: #{tpu_custom_call.1} parent=31 // pred_check_branch
          %221 = sbr.rel (%p219) target = $region36
        $region35: #{tpu_custom_call.1} parent=31 // pred_region
          %p222 = scmp.lt.s32.totalorder %s23, 1
          %s223 = scalar_select %p222, %s23, 1
          %s224 = smul.addr %s223, 3
          %s225 = smul.addr %s224, 8
          %s226 = scalar_lea.vmem %s0, %s225
        $region36: #{tpu_custom_call.1} parent=31 // pred_fallthru
          _
      $region32: #{tpu_custom_call.1} parent=5 // pred_fallthru
        _
      %p227 = scmp.le.s32.totalorder 1, %s16
      %p228 = scmp.lt.s32.totalorder %s16, 5
      %p229 = pnand %p227, %p228
      %p230 = pneg %p229
      // Predicated region
      $region37: #{tpu_custom_call.1} parent=5 // pred_check
        _
      $region38: #{tpu_custom_call.1} parent=5 // pred_check_branch
        %232 = sbr.rel (%p229) target = $region40
      $region39: #{tpu_custom_call.1} parent=5 // pred_region
        %s233 = ssub.s32 %s16, 1
        // Predicated region
        $region41: #{tpu_custom_call.1} parent=39 // pred_check
          %p234 = pneg %p75
        $region42: #{tpu_custom_call.1} parent=39 // pred_check_branch
          %236 = sbr.rel (%p234) target = $region44
        $region43: #{tpu_custom_call.1} parent=39 // pred_region
          %238 = dma.done [#allocation4], 3072
        $region44: #{tpu_custom_call.1} parent=39 // pred_fallthru
          _
        // Predicated region
        $region45: #{tpu_custom_call.1} parent=39 // pred_check
          %p239 = pneg %p117
        $region46: #{tpu_custom_call.1} parent=39 // pred_check_branch
          %241 = sbr.rel (%p239) target = $region48
        $region47: #{tpu_custom_call.1} parent=39 // pred_region
          %243 = dma.done [#allocation7], 6144
        $region48: #{tpu_custom_call.1} parent=39 // pred_fallthru
          _
        %p244 = scmp.lt.s32.totalorder %s25, 1
        %s245 = scalar_select %p244, %s25, 1
        %s246 = smul.addr %s245, 3
        %s247 = smul.addr %s246, 8
        %s248 = scalar_lea.vmem %s0, %s247
        %p249 = pneg %p54
        %p250 = pneg %p51
        %p251 = pneg %p75
        %p252 = pneg %p72
        %p253 = pneg %p96
        %p254 = pneg %p93
        %p255 = pneg %p117
        %p256 = pneg %p114
        %p257 = pneg %p138
        %p258 = pneg %p135
        %p259 = pneg %p166
        %p260 = pneg %p163
        %s261 = sand.u32 %s153, 1
        %s262 = scalar_lea.sflag [#allocation5], %s261
        %s263 = sand.u32 %s153, 1
        %s264 = smul.addr %s263, 8
        %s265 = scalar_lea.vmem [#allocation8], %s264
        %p266 = scmp.lt.s32.totalorder %s25, 1
        %s267 = scalar_select %p266, %s25, 1
        %s268 = smul.addr %s267, 3
        %s269 = smul.addr %s268, 8
        %s270 = scalar_lea.vmem %s0, %s269
        %s271 = smul.u32 %s26, 8
        %s272 = scalar_lea.vmem %s270, %s271
        %v273 = vld [vmem:[%s272] sm:$0xff]
        %v274 = vld [vmem:[%s272 + $0x8] sm:$0x3]
        %v275 = vld [vmem:[#allocation3] sm:$0xff]
        %v276 = vld [vmem:[#allocation3 + $0x8] sm:$0xff]
        %v277 = vld [vmem:[#allocation3 + $0x10] sm:$0xff]
        %v278 = vld [vmem:[#allocation3 + $0x18] sm:$0xff]
        %v279 = vld [vmem:[#allocation3 + $0x20] sm:$0xff]
        %v280 = vld [vmem:[#allocation3 + $0x28] sm:$0xff]
        %v281 = vld [vmem:[#allocation3 + $0x30] sm:$0xff]
        %v282 = vld [vmem:[#allocation3 + $0x38] sm:$0xff]
        %s283 = sadd.s32 %s271, 1
        %s284 = scalar_lea.vmem %s270, %s283
        %v285 = vld [vmem:[%s284] sm:$0xff]
        %v286 = vld [vmem:[%s284 + $0x8] sm:$0x3]
        %s287 = scalar_lea.vmem [#allocation3], 64
        %v288 = vld [vmem:[%s287] sm:$0xff]
        %v289 = vld [vmem:[%s287 + $0x8] sm:$0xff]
        %v290 = vld [vmem:[%s287 + $0x10] sm:$0xff]
        %v291 = vld [vmem:[%s287 + $0x18] sm:$0xff]
        %v292 = vld [vmem:[%s287 + $0x20] sm:$0xff]
        %v293 = vld [vmem:[%s287 + $0x28] sm:$0xff]
        %v294 = vld [vmem:[%s287 + $0x30] sm:$0xff]
        %v295 = vld [vmem:[%s287 + $0x38] sm:$0xff]
        %vm296 = vcmask 523264
        %v298 = vsel %vm296, %v285, 0
        %v301 = vsel %vm296, %v286, 0
        %303 = vmatpush.msra.mxu0 0.0
        %304 = vmatpush.msra.mxu0 0.0
        %305 = vmatpush.msra.mxu0 0.0
        %306 = vmatpush.msra.mxu0 0.0
        %307 = vmatpush.msra.mxu0 0.0
        %308 = vmatpush.msra.mxu0 0.0
        %309 = vmatpush.msra.mxu0 0.0
        %310 = vmatpush.msra.mxu0 0.0
        %311 = vmatpush.msra.mxu0 %v295
        %312 = vmatpush.msra.mxu0 %v294
        %313 = vmatpush.msra.mxu0 %v293
        %314 = vmatpush.msra.mxu0 %v292
        %315 = vmatpush.msra.mxu0 %v291
        %316 = vmatpush.msra.mxu0 %v290
        %317 = vmatpush.msra.mxu0 %v289
        %318 = vmatpush.msra.mxu0 %v288
        %319 = vmatmul.f32.gmra.mxu0 %v298
        %v320 = vpop.f32.mrf.mxu0
        %v321 = vadd.f32 0.0, %v320
        %322 = vmatmul.f32.gmra.mxu0 %v301
        %v323 = vpop.f32.mrf.mxu0
        %v324 = vadd.f32 0.0, %v323
        %325 = vdwg.mxu0
        %v327 = vsel %vm296, %v273, 0
        %v330 = vsel %vm296, %v274, 0
        %332 = vmatpush.msra.mxu0 0.0
        %333 = vmatpush.msra.mxu0 0.0
        %334 = vmatpush.msra.mxu0 0.0
        %335 = vmatpush.msra.mxu0 0.0
        %336 = vmatpush.msra.mxu0 0.0
        %337 = vmatpush.msra.mxu0 0.0
        %338 = vmatpush.msra.mxu0 0.0
        %339 = vmatpush.msra.mxu0 0.0
        %340 = vmatpush.msra.mxu0 %v282
        %341 = vmatpush.msra.mxu0 %v281
        %342 = vmatpush.msra.mxu0 %v280
        %343 = vmatpush.msra.mxu0 %v279
        %344 = vmatpush.msra.mxu0 %v278
        %345 = vmatpush.msra.mxu0 %v277
        %346 = vmatpush.msra.mxu0 %v276
        %347 = vmatpush.msra.mxu0 %v275
        %348 = vmatmul.f32.gmra.mxu0 %v327
        %v349 = vpop.f32.mrf.mxu0
        %v350 = vadd.f32 %v321, %v349
        %351 = vmatmul.f32.gmra.mxu0 %v330
        %v352 = vpop.f32.mrf.mxu0
        %v353 = vadd.f32 %v324, %v352
        %354 = vdwg.mxu0
        %s355 = sadd.s32 %s271, 2
        %s356 = scalar_lea.vmem %s270, %s355
        %v357 = vld [vmem:[%s356] sm:$0xff]
        %v358 = vld [vmem:[%s356 + $0x8] sm:$0x3]
        %s359 = scalar_lea.vmem [#allocation3], 128
        %v360 = vld [vmem:[%s359] sm:$0xff]
        %v361 = vld [vmem:[%s359 + $0x8] sm:$0xff]
        %v362 = vld [vmem:[%s359 + $0x10] sm:$0xff]
        %v363 = vld [vmem:[%s359 + $0x18] sm:$0xff]
        %v364 = vld [vmem:[%s359 + $0x20] sm:$0xff]
        %v365 = vld [vmem:[%s359 + $0x28] sm:$0xff]
        %v366 = vld [vmem:[%s359 + $0x30] sm:$0xff]
        %v367 = vld [vmem:[%s359 + $0x38] sm:$0xff]
        %v369 = vsel %vm296, %v357, 0
        %v372 = vsel %vm296, %v358, 0
        %374 = vmatpush.msra.mxu0 0.0
        %375 = vmatpush.msra.mxu0 0.0
        %376 = vmatpush.msra.mxu0 0.0
        %377 = vmatpush.msra.mxu0 0.0
        %378 = vmatpush.msra.mxu0 0.0
        %379 = vmatpush.msra.mxu0 0.0
        %380 = vmatpush.msra.mxu0 0.0
        %381 = vmatpush.msra.mxu0 0.0
        %382 = vmatpush.msra.mxu0 %v367
        %383 = vmatpush.msra.mxu0 %v366
        %384 = vmatpush.msra.mxu0 %v365
        %385 = vmatpush.msra.mxu0 %v364
        %386 = vmatpush.msra.mxu0 %v363
        %387 = vmatpush.msra.mxu0 %v362
        %388 = vmatpush.msra.mxu0 %v361
        %389 = vmatpush.msra.mxu0 %v360
        %390 = vmatmul.f32.gmra.mxu0 %v369
        %v391 = vpop.f32.mrf.mxu0
        %v392 = vadd.f32 0.0, %v391
        %393 = vmatmul.f32.gmra.mxu0 %v372
        %v394 = vpop.f32.mrf.mxu0
        %v395 = vadd.f32 0.0, %v394
        %396 = vdwg.mxu0
        %v397 = vadd.f32 %v350, %v392
        %v398 = vadd.f32 %v353, %v395
        %v399 = vld [vmem:[%s2] sm:$0x1]
        %v401 = vperm.slane %v399, 0
        %v403 = vadd.f32 %v397, %v401
        %v404 = vadd.f32 %v398, %v401
        %v405 = vmax.f32 %v403, 0.0
        %v406 = vmax.f32 %v404, 0.0
        %407 = vst [vmem:[#allocation2] sm:$0xff] %v405
        %408 = vst [vmem:[#allocation2 + $0x8] sm:$0x3] %v406
        %p409 = scmp.eq.s32.totalorder %s26, 0
        // Predicated region
        $region49: #{tpu_custom_call.1} parent=39 // pred_check
          %p410 = pneg %p409
        $region50: #{tpu_custom_call.1} parent=39 // pred_check_branch
          %412 = sbr.rel (%p410) target = $region52
        $region51: #{tpu_custom_call.1} parent=39 // pred_region
          %413 = vst [vmem:[#allocation2] sm:$0x1] 0.0
        $region52: #{tpu_custom_call.1} parent=39 // pred_fallthru
          _
        %p414 = scmp.eq.s32.totalorder %s26, 1
        // Predicated region
        $region53: #{tpu_custom_call.1} parent=39 // pred_check
          %p415 = pneg %p414
        $region54: #{tpu_custom_call.1} parent=39 // pred_check_branch
          %417 = sbr.rel (%p415) target = $region56
        $region55: #{tpu_custom_call.1} parent=39 // pred_region
          %418 = vst [vmem:[#allocation2 + $0x9] sm:$0x1] 0.0
        $region56: #{tpu_custom_call.1} parent=39 // pred_fallthru
          _
        %v419 = vld [vmem:[#allocation2] sm:$0xff]
        %v420 = vld [vmem:[#allocation6] sm:$0xff]
        %v421 = vld [vmem:[#allocation6 + $0x8] sm:$0xff]
        %v422 = vld [vmem:[#allocation6 + $0x10] sm:$0xff]
        %v423 = vld [vmem:[#allocation6 + $0x18] sm:$0xff]
        %v424 = vld [vmem:[#allocation6 + $0x20] sm:$0xff]
        %v425 = vld [vmem:[#allocation6 + $0x28] sm:$0xff]
        %v426 = vld [vmem:[#allocation6 + $0x30] sm:$0xff]
        %v427 = vld [vmem:[#allocation6 + $0x38] sm:$0xff]
        %v428 = vld [vmem:[#allocation6 + $0x40] sm:$0xff]
        %v429 = vld [vmem:[#allocation6 + $0x48] sm:$0xff]
        %v430 = vld [vmem:[#allocation6 + $0x50] sm:$0xff]
        %v431 = vld [vmem:[#allocation6 + $0x58] sm:$0xff]
        %v432 = vld [vmem:[#allocation6 + $0x60] sm:$0xff]
        %v433 = vld [vmem:[#allocation6 + $0x68] sm:$0xff]
        %v434 = vld [vmem:[#allocation6 + $0x70] sm:$0xff]
        %v435 = vld [vmem:[#allocation6 + $0x78] sm:$0xff]
        %v436 = vld [vmem:[#allocation2 + $0x1] sm:$0xff]
        %s437 = scalar_lea.vmem [#allocation6], 128
        %v438 = vld [vmem:[%s437] sm:$0xff]
        %v439 = vld [vmem:[%s437 + $0x8] sm:$0xff]
        %v440 = vld [vmem:[%s437 + $0x10] sm:$0xff]
        %v441 = vld [vmem:[%s437 + $0x18] sm:$0xff]
        %v442 = vld [vmem:[%s437 + $0x20] sm:$0xff]
        %v443 = vld [vmem:[%s437 + $0x28] sm:$0xff]
        %v444 = vld [vmem:[%s437 + $0x30] sm:$0xff]
        %v445 = vld [vmem:[%s437 + $0x38] sm:$0xff]
        %v446 = vld [vmem:[%s437 + $0x40] sm:$0xff]
        %v447 = vld [vmem:[%s437 + $0x48] sm:$0xff]
        %v448 = vld [vmem:[%s437 + $0x50] sm:$0xff]
        %v449 = vld [vmem:[%s437 + $0x58] sm:$0xff]
        %v450 = vld [vmem:[%s437 + $0x60] sm:$0xff]
        %v451 = vld [vmem:[%s437 + $0x68] sm:$0xff]
        %v452 = vld [vmem:[%s437 + $0x70] sm:$0xff]
        %v453 = vld [vmem:[%s437 + $0x78] sm:$0xff]
        %454 = vmatpush.msra.mxu0 %v453
        %455 = vmatpush.msra.mxu0 %v452
        %456 = vmatpush.msra.mxu0 %v451
        %457 = vmatpush.msra.mxu0 %v450
        %458 = vmatpush.msra.mxu0 %v449
        %459 = vmatpush.msra.mxu0 %v448
        %460 = vmatpush.msra.mxu0 %v447
        %461 = vmatpush.msra.mxu0 %v446
        %462 = vmatpush.msra.mxu0 %v445
        %463 = vmatpush.msra.mxu0 %v444
        %464 = vmatpush.msra.mxu0 %v443
        %465 = vmatpush.msra.mxu0 %v442
        %466 = vmatpush.msra.mxu0 %v441
        %467 = vmatpush.msra.mxu0 %v440
        %468 = vmatpush.msra.mxu0 %v439
        %469 = vmatpush.msra.mxu0 %v438
        %470 = vmatmul.f32.gmra.mxu0 %v436
        %v471 = vpop.f32.mrf.mxu0
        %v472 = vadd.f32 0.0, %v471
        %473 = vdwg.mxu0
        %474 = vmatpush.msra.mxu0 %v435
        %475 = vmatpush.msra.mxu0 %v434
        %476 = vmatpush.msra.mxu0 %v433
        %477 = vmatpush.msra.mxu0 %v432
        %478 = vmatpush.msra.mxu0 %v431
        %479 = vmatpush.msra.mxu0 %v430
        %480 = vmatpush.msra.mxu0 %v429
        %481 = vmatpush.msra.mxu0 %v428
        %482 = vmatpush.msra.mxu0 %v427
        %483 = vmatpush.msra.mxu0 %v426
        %484 = vmatpush.msra.mxu0 %v425
        %485 = vmatpush.msra.mxu0 %v424
        %486 = vmatpush.msra.mxu0 %v423
        %487 = vmatpush.msra.mxu0 %v422
        %488 = vmatpush.msra.mxu0 %v421
        %489 = vmatpush.msra.mxu0 %v420
        %490 = vmatmul.f32.gmra.mxu0 %v419
        %v491 = vpop.f32.mrf.mxu0
        %v492 = vadd.f32 %v472, %v491
        %493 = vdwg.mxu0
        %v494 = vld [vmem:[#allocation2 + $0x2] sm:$0xff]
        %s495 = scalar_lea.vmem [#allocation6], 256
        %v496 = vld [vmem:[%s495] sm:$0xff]
        %v497 = vld [vmem:[%s495 + $0x8] sm:$0xff]
        %v498 = vld [vmem:[%s495 + $0x10] sm:$0xff]
        %v499 = vld [vmem:[%s495 + $0x18] sm:$0xff]
        %v500 = vld [vmem:[%s495 + $0x20] sm:$0xff]
        %v501 = vld [vmem:[%s495 + $0x28] sm:$0xff]
        %v502 = vld [vmem:[%s495 + $0x30] sm:$0xff]
        %v503 = vld [vmem:[%s495 + $0x38] sm:$0xff]
        %v504 = vld [vmem:[%s495 + $0x40] sm:$0xff]
        %v505 = vld [vmem:[%s495 + $0x48] sm:$0xff]
        %v506 = vld [vmem:[%s495 + $0x50] sm:$0xff]
        %v507 = vld [vmem:[%s495 + $0x58] sm:$0xff]
        %v508 = vld [vmem:[%s495 + $0x60] sm:$0xff]
        %v509 = vld [vmem:[%s495 + $0x68] sm:$0xff]
        %v510 = vld [vmem:[%s495 + $0x70] sm:$0xff]
        %v511 = vld [vmem:[%s495 + $0x78] sm:$0xff]
        %512 = vmatpush.msra.mxu0 %v511
        %513 = vmatpush.msra.mxu0 %v510
        %514 = vmatpush.msra.mxu0 %v509
        %515 = vmatpush.msra.mxu0 %v508
        %516 = vmatpush.msra.mxu0 %v507
        %517 = vmatpush.msra.mxu0 %v506
        %518 = vmatpush.msra.mxu0 %v505
        %519 = vmatpush.msra.mxu0 %v504
        %520 = vmatpush.msra.mxu0 %v503
        %521 = vmatpush.msra.mxu0 %v502
        %522 = vmatpush.msra.mxu0 %v501
        %523 = vmatpush.msra.mxu0 %v500
        %524 = vmatpush.msra.mxu0 %v499
        %525 = vmatpush.msra.mxu0 %v498
        %526 = vmatpush.msra.mxu0 %v497
        %527 = vmatpush.msra.mxu0 %v496
        %528 = vmatmul.f32.gmra.mxu0 %v494
        %v529 = vpop.f32.mrf.mxu0
        %v530 = vadd.f32 0.0, %v529
        %531 = vdwg.mxu0
        %v532 = vadd.f32 %v492, %v530
        %v533 = vld [vmem:[%s4] sm:$0x1]
        %v535 = vperm.slane %v533, 0
        %v537 = vadd.f32 %v532, %v535
        %v538 = vmax.f32 %v537, 0.0
        %539 = vst [vmem:[%s265] sm:$0xff] %v538
        %s540 = sand.u32 %s153, 1
        %s541 = scalar_lea.sflag [#allocation5], %s540
        %s542 = sand.u32 %s153, 1
        %s543 = smul.addr %s542, 8
        %s544 = scalar_lea.vmem [#allocation8], %s543
        // Predicated region
        $region57: #{tpu_custom_call.1} parent=39 // pred_check
          %p545 = pneg %p163
        $region58: #{tpu_custom_call.1} parent=39 // pred_check_branch
          %547 = sbr.rel (%p545) target = $region60
        $region59: #{tpu_custom_call.1} parent=39 // pred_region
          %549 = vsyncadd %s541, 0
          %s550 = smul.addr %s25, 2
          %s551 = sadd.s32 %s26, %s550
          %s552 = smul.addr %s551, 8
          %s553 = scalar_lea.hbm %s5, %s552
          %s555 = sshll.u32 %s544, 4
          %s556 = int_to_ptr.vmem [resolvable:$true] %s555
          %s557 = sshll.u32 %s553, 4
          %s558 = int_to_ptr.hbm [resolvable:$true] %s557
          %560 = dma.vmem_to_hbm [thread:$0]  %s556, 128, %s558, %s541
        $region60: #{tpu_custom_call.1} parent=39 // pred_fallthru
          _
      $region40: #{tpu_custom_call.1} parent=5 // pred_fallthru
        _
      %p561 = scmp.le.s32.totalorder 2, %s16
      // Predicated region
      $region61: #{tpu_custom_call.1} parent=5 // pred_check
        %p562 = pneg %p561
      $region62: #{tpu_custom_call.1} parent=5 // pred_check_branch
        %564 = sbr.rel (%p562) target = $region64
      $region63: #{tpu_custom_call.1} parent=5 // pred_region
        %s565 = ssub.s32 %s16, 2
        // Predicated region
        $region65: #{tpu_custom_call.1} parent=63 // pred_check
          %p566 = pneg %p169
        $region66: #{tpu_custom_call.1} parent=63 // pred_check_branch
          %568 = sbr.rel (%p566) target = $region68
        $region67: #{tpu_custom_call.1} parent=63 // pred_region
          %s569 = sand.u32 %s154, 1
          %s570 = scalar_lea.sflag [#allocation5], %s569
          %s571 = sand.u32 %s154, 1
          %s572 = smul.addr %s571, 8
          %s573 = scalar_lea.vmem [#allocation8], %s572
          %575 = dma.done %s570, 128
        $region68: #{tpu_custom_call.1} parent=63 // pred_fallthru
          _
      $region64: #{tpu_custom_call.1} parent=5 // pred_fallthru
        _
    $region6: #{tpu_custom_call.1} parent=1 // loop_footer
      %s20 = sadd.s32 1, %s16
    $region7: #{tpu_custom_call.1} parent=1 // loop_footer_branch
      %15 = sbr.rel target = $region3
    $region8: #{tpu_custom_call.1} parent=1 // loop_exit
      _
    %576 = vsyncpa [#allocation4], 1
    %s577 = scalar_lea.sflag [#allocation4], 1
    %578 = vsyncpa %s577, 1
    %579 = vsyncpa [#allocation7], 1
    %580 = vsyncpa [#allocation5], 1
    %s581 = scalar_lea.sflag [#allocation5], 1
    %582 = vsyncpa %s581, 1

</llo_original>
